<compile_context>
chip_gen: v5e
topology: v5e:2x2
jax: 0.10.0
libtpu: 0.0.40
codegen_flags: <defaults>
</compile_context>

<pallas_src>
import functools

import jax
import jax.numpy as jnp
from jax.experimental import pallas as pl
from jax.experimental.pallas import tpu as pltpu

STATE_SIZE = 93
ACTION_SIZE = 5
HIDDEN = 128
HEAD_W = 8          # fused head width: lanes 0..4 = pi logits, lane 5 = v, lanes 6..7 = pad


def _round_up(n, m):
    return (n + m - 1) // m * m


def actor_critic_kernel(x_ref, w1_ref, b1_ref, w2_ref, b2_ref, wh_ref, bh_ref, out_ref):
    x = x_ref[...]                                                     # [TB, 93] f32 (unpadded)

    # d1 + ReLU  (K=93 contraction; Mosaic pads the layout internally)
    h1 = jnp.dot(x, w1_ref[...], preferred_element_type=jnp.float32) + b1_ref[...]
    h1 = jnp.maximum(h1, 0.0)                                          # [TB, 128]

    # d2 + ReLU
    h2 = jnp.dot(h1, w2_ref[...], preferred_element_type=jnp.float32) + b2_ref[...]
    h2 = jnp.maximum(h2, 0.0)                                          # [TB, 128]

    # fused narrow head: lanes 0..4 = pi logits, lane 5 = v, lanes 6..7 = zero pad
    heads = jnp.dot(h2, wh_ref[...], preferred_element_type=jnp.float32) + bh_ref[...]  # [TB, 8]

    lane = jax.lax.broadcasted_iota(jnp.int32, heads.shape, dimension=1)
    logits = jnp.where(lane < ACTION_SIZE, heads, -jnp.inf)            # mask non-action lanes
    m = jnp.max(logits, axis=-1, keepdims=True)
    e = jnp.exp(logits - m)                                            # exp(-inf)==0 outside 5 classes
    denom = jnp.sum(e, axis=-1, keepdims=True)
    r = pl.reciprocal(denom, approx=True)                              # EUP vrcp (free slot)
    r = r * (2.0 - denom * r)                                          # one Newton step -> ~f32 accuracy
    pi_full = e * r                                                    # zeros outside the 5 classes

    # single narrow [TB, 8] store: lanes 0..4 = pi, lane 5 = v, lanes 6..7 = 0
    out_ref[...] = jnp.where(lane == ACTION_SIZE, heads, pi_full)


def prepare_params(params):
    """One-time fusion of the pi/v heads into a single [128, 8] weight / [1, 8] bias."""
    wh = (jnp.zeros((HIDDEN, HEAD_W), jnp.float32)
          .at[:, :ACTION_SIZE].set(params["wpi"])
          .at[:, ACTION_SIZE:ACTION_SIZE + 1].set(params["wv"]))
    bh = (jnp.zeros((1, HEAD_W), jnp.float32)
          .at[:, :ACTION_SIZE].set(params["bpi"])
          .at[:, ACTION_SIZE:ACTION_SIZE + 1].set(params["bv"]))
    return dict(w1=params["w1"], b1=params["b1"],
                w2=params["w2"], b2=params["b2"],
                wh=wh, bh=bh)


@functools.partial(jax.jit, static_argnames=("block_b",))
def actor_critic_forward(x, prepared, *, block_b=4096):
    """x: [B, 93] f32. prepared: dict from prepare_params. Returns (pi [B,5], v [B,1])."""
    B = x.shape[0]
    B8 = _round_up(B, 8)
    # >=2 grid steps for moderate/large batches (v7x has 2 TensorCores), capped at block_b.
    TB = min(block_b, max(8, _round_up(pl.cdiv(B8, 2), 8)))
    B_pad = _round_up(B8, TB)

    # only pad batch rows when needed (no 93->128 feature pad; no copy when B % TB == 0)
    x_p = x if B == B_pad else jnp.zeros((B_pad, STATE_SIZE), jnp.float32).at[:B].set(x)

    const = lambda a: pl.BlockSpec(a.shape, lambda i: (0, 0))   # weights resident across the grid

    slab = pl.pallas_call(
        actor_critic_kernel,
        out_shape=jax.ShapeDtypeStruct((B_pad, HEAD_W), jnp.float32),
        grid=(B_pad // TB,),
        in_specs=[
            pl.BlockSpec((TB, STATE_SIZE), lambda i: (i, 0)),
            const(prepared["w1"]), const(prepared["b1"]),
            const(prepared["w2"]), const(prepared["b2"]),
            const(prepared["wh"]), const(prepared["bh"]),
        ],
        out_specs=pl.BlockSpec((TB, HEAD_W), lambda i: (i, 0)),
        compiler_params=pltpu.CompilerParams(
            dimension_semantics=("parallel",),
            vmem_limit_bytes=48 * 1024 * 1024,
        ),
    )(x_p, prepared["w1"], prepared["b1"], prepared["w2"], prepared["b2"],
      prepared["wh"], prepared["bh"])

    pi = slab[:B, :ACTION_SIZE]
    v = slab[:B, ACTION_SIZE:ACTION_SIZE + 1]
    return pi, v


def init_params(key):
    """Deterministic synthetic parameters (PyTorch nn.Linear-like uniform init)."""
    def linear(key, fan_in, fan_out):
        kw, kb = jax.random.split(key)
        bound = 1.0 / jnp.sqrt(fan_in)
        # stored as [in, out] so the kernel computes x @ W + b
        w = jax.random.uniform(kw, (fan_in, fan_out), jnp.float32, -bound, bound)
        b = jax.random.uniform(kb, (1, fan_out), jnp.float32, -bound, bound)
        return w, b

    k1, k2, k3, k4 = jax.random.split(key, 4)
    w1, b1 = linear(k1, STATE_SIZE, HIDDEN)
    w2, b2 = linear(k2, HIDDEN, HIDDEN)
    wpi, bpi = linear(k3, HIDDEN, ACTION_SIZE)
    wv, bv = linear(k4, HIDDEN, 1)
    return dict(w1=w1, b1=b1, w2=w2, b2=b2, wpi=wpi, bpi=bpi, wv=wv, bv=bv)


def reference_forward(x, p):
    h1 = jnp.maximum(x @ p["w1"] + p["b1"], 0.0)
    h2 = jnp.maximum(h1 @ p["w2"] + p["b2"], 0.0)
    logits = h2 @ p["wpi"] + p["bpi"]
    pi = jax.nn.softmax(logits, axis=-1)
    v = h2 @ p["wv"] + p["bv"]
    return pi, v


if __name__ == "__main__":
    key = jax.random.PRNGKey(0)
    kx, kp = jax.random.split(key)
    params = init_params(kp)
    prepared = prepare_params(params)                       # one-time pad/fuse, hoisted out of the step
    jax.block_until_ready(prepared["wh"])

    ok = True
    # (B, block_b): 8 = aligned, 6 = padded-tail, 40/16 = multi-step grid + ragged-to-tile pad
    for B, block_b in ((8, 4096), (6, 4096), (40, 16)):
        x = jax.random.normal(jax.random.fold_in(kx, B), (B, STATE_SIZE), jnp.float32)
        pi, v = actor_critic_forward(x, prepared, block_b=block_b)
        pi = jax.block_until_ready(pi)
        v = jax.block_until_ready(v)

        pi_ref, v_ref = reference_forward(x, params)
        ok &= pi.shape == (B, ACTION_SIZE) and v.shape == (B, 1)
        ok &= bool(jnp.allclose(pi, pi_ref, atol=1e-5, rtol=1e-5))
        ok &= bool(jnp.allclose(v, v_ref, atol=1e-5, rtol=1e-5))
        ok &= bool(jnp.allclose(jnp.sum(pi, axis=-1), 1.0, atol=1e-5))

    assert ok
    print("KERNEL_OK")
</pallas_src>

<mosaic_0001>
module attributes {stable_mosaic.version = 11 : i64} {
  func.func @actor_critic_kernel(%arg0: i32, %arg1: memref<8x93xf32, #tpu.memory_space<vmem>>, %arg2: memref<93x128xf32, #tpu.memory_space<vmem>>, %arg3: memref<1x128xf32, #tpu.memory_space<vmem>>, %arg4: memref<128x128xf32, #tpu.memory_space<vmem>>, %arg5: memref<1x128xf32, #tpu.memory_space<vmem>>, %arg6: memref<128x8xf32, #tpu.memory_space<vmem>>, %arg7: memref<1x8xf32, #tpu.memory_space<vmem>>, %arg8: memref<8x8xf32, #tpu.memory_space<vmem>>) attributes {dimension_semantics = [#tpu.dimension_semantics<parallel>], iteration_bounds = array<i64: 1>, scalar_prefetch = 0 : i64, scratch_operands = 0 : i64, tpu.core_type = #tpu.core_type<tc>, window_params = [{transform_indices = @transform_0, window_bounds = array<i64: 8, 93>}, {pipeline_mode = #tpu.pipeline_mode<synchronous>, transform_indices = @transform_1, window_bounds = array<i64: 93, 128>}, {pipeline_mode = #tpu.pipeline_mode<synchronous>, transform_indices = @transform_2, window_bounds = array<i64: 1, 128>}, {pipeline_mode = #tpu.pipeline_mode<synchronous>, transform_indices = @transform_3, window_bounds = array<i64: 128, 128>}, {pipeline_mode = #tpu.pipeline_mode<synchronous>, transform_indices = @transform_4, window_bounds = array<i64: 1, 128>}, {pipeline_mode = #tpu.pipeline_mode<synchronous>, transform_indices = @transform_5, window_bounds = array<i64: 128, 8>}, {pipeline_mode = #tpu.pipeline_mode<synchronous>, transform_indices = @transform_6, window_bounds = array<i64: 1, 8>}, {transform_indices = @transform_7, window_bounds = array<i64: 8, 8>}]} {
    %c0 = arith.constant 0 : index
    %c0_0 = arith.constant 0 : index
    %0 = vector.load %arg1[%c0, %c0_0] : memref<8x93xf32, #tpu.memory_space<vmem>>, vector<8x93xf32>
    %c0_1 = arith.constant 0 : index
    %c0_2 = arith.constant 0 : index
    %1 = vector.load %arg2[%c0_1, %c0_2] : memref<93x128xf32, #tpu.memory_space<vmem>>, vector<93x128xf32>
    %cst = arith.constant dense<0.000000e+00> : vector<8x128xf32>
    %2 = tpu.matmul %0, %1, %cst {dimension_numbers = #tpu.dot_dimension_numbers<[1], [0], [0], [1], [0, 0, 1, 1], [], []>} : vector<8x93xf32>, vector<93x128xf32>, vector<8x128xf32> -> vector<8x128xf32>
    %c0_3 = arith.constant 0 : index
    %c0_4 = arith.constant 0 : index
    %3 = vector.load %arg3[%c0_3, %c0_4] : memref<1x128xf32, #tpu.memory_space<vmem>>, vector<1x128xf32>
    %4 = vector.broadcast %3 : vector<1x128xf32> to vector<8x128xf32>
    %5 = arith.addf %2, %4 : vector<8x128xf32>
    %cst_5 = arith.constant 0.000000e+00 : f32
    %6 = vector.broadcast %cst_5 : f32 to vector<8x128xf32>
    %7 = arith.maximumf %5, %6 : vector<8x128xf32>
    %c0_6 = arith.constant 0 : index
    %c0_7 = arith.constant 0 : index
    %8 = vector.load %arg4[%c0_6, %c0_7] : memref<128x128xf32, #tpu.memory_space<vmem>>, vector<128x128xf32>
    %cst_8 = arith.constant dense<0.000000e+00> : vector<8x128xf32>
    %9 = tpu.matmul %7, %8, %cst_8 {dimension_numbers = #tpu.dot_dimension_numbers<[1], [0], [0], [1], [0, 0, 1, 1], [], []>} : vector<8x128xf32>, vector<128x128xf32>, vector<8x128xf32> -> vector<8x128xf32>
    %c0_9 = arith.constant 0 : index
    %c0_10 = arith.constant 0 : index
    %10 = vector.load %arg5[%c0_9, %c0_10] : memref<1x128xf32, #tpu.memory_space<vmem>>, vector<1x128xf32>
    %11 = vector.broadcast %10 : vector<1x128xf32> to vector<8x128xf32>
    %12 = arith.addf %9, %11 : vector<8x128xf32>
    %cst_11 = arith.constant 0.000000e+00 : f32
    %13 = vector.broadcast %cst_11 : f32 to vector<8x128xf32>
    %14 = arith.maximumf %12, %13 : vector<8x128xf32>
    %c0_12 = arith.constant 0 : index
    %c0_13 = arith.constant 0 : index
    %15 = vector.load %arg6[%c0_12, %c0_13] : memref<128x8xf32, #tpu.memory_space<vmem>>, vector<128x8xf32>
    %cst_14 = arith.constant dense<0.000000e+00> : vector<8x8xf32>
    %16 = tpu.matmul %14, %15, %cst_14 {dimension_numbers = #tpu.dot_dimension_numbers<[1], [0], [0], [1], [0, 0, 1, 1], [], []>} : vector<8x128xf32>, vector<128x8xf32>, vector<8x8xf32> -> vector<8x8xf32>
    %c0_15 = arith.constant 0 : index
    %c0_16 = arith.constant 0 : index
    %17 = vector.load %arg7[%c0_15, %c0_16] : memref<1x8xf32, #tpu.memory_space<vmem>>, vector<1x8xf32>
    %18 = vector.broadcast %17 : vector<1x8xf32> to vector<8x8xf32>
    %19 = arith.addf %16, %18 : vector<8x8xf32>
    %20 = tpu.iota {dimensions = array<i32: 1>} : vector<8x8xi32>
    %c5_i32 = arith.constant 5 : i32
    %21 = vector.broadcast %c5_i32 : i32 to vector<8x8xi32>
    %22 = arith.cmpi slt, %20, %21 : vector<8x8xi32>
    %cst_17 = arith.constant 0xFF800000 : f32
    %23 = vector.broadcast %cst_17 : f32 to vector<8x8xf32>
    %24 = arith.select %22, %19, %23 : vector<8x8xi1>, vector<8x8xf32>
    %cst_18 = arith.constant dense<0xFF800000> : vector<8xf32>
    %25 = vector.multi_reduction <maximumf>, %24, %cst_18 [1] : vector<8x8xf32> to vector<8xf32>
    %26 = vector.shape_cast %25 : vector<8xf32> to vector<8x1xf32>
    %27 = vector.broadcast %26 : vector<8x1xf32> to vector<8x8xf32>
    %28 = arith.subf %24, %27 : vector<8x8xf32>
    %29 = math.exp %28 : vector<8x8xf32>
    %cst_19 = arith.constant dense<0.000000e+00> : vector<8xf32>
    %30 = vector.multi_reduction <add>, %29, %cst_19 [1] : vector<8x8xf32> to vector<8xf32>
    %31 = vector.shape_cast %30 : vector<8xf32> to vector<8x1xf32>
    %32 = tpu.reciprocal %31 {approx = true} : vector<8x1xf32> -> vector<8x1xf32>
    %33 = arith.mulf %31, %32 : vector<8x1xf32>
    %cst_20 = arith.constant 2.000000e+00 : f32
    %34 = vector.broadcast %cst_20 : f32 to vector<8x1xf32>
    %35 = arith.subf %34, %33 : vector<8x1xf32>
    %36 = arith.mulf %32, %35 : vector<8x1xf32>
    %37 = vector.broadcast %36 : vector<8x1xf32> to vector<8x8xf32>
    %38 = arith.mulf %29, %37 : vector<8x8xf32>
    %c5_i32_21 = arith.constant 5 : i32
    %39 = vector.broadcast %c5_i32_21 : i32 to vector<8x8xi32>
    %40 = arith.cmpi eq, %20, %39 : vector<8x8xi32>
    %41 = arith.select %40, %19, %38 : vector<8x8xi1>, vector<8x8xf32>
    %c0_22 = arith.constant 0 : index
    %c0_23 = arith.constant 0 : index
    %42 = vector.load %arg8[%c0_22, %c0_23] : memref<8x8xf32, #tpu.memory_space<vmem>>, vector<8x8xf32>
    tpu.vector_store %arg8[%c0_22, %c0_23], %41 {strides = array<i32>} : memref<8x8xf32, #tpu.memory_space<vmem>>, vector<8x8xf32>,
    return
  }
  func.func @transform_0(%arg0: i32) -> (i32, i32) {
    %c0_i32 = arith.constant 0 : i32
    %c0_i32_0 = arith.constant 0 : i32
    return %arg0, %c0_i32 : i32, i32
  }
  func.func @transform_1(%arg0: i32) -> (i32, i32) {
    %c0_i32 = arith.constant 0 : i32
    %c0_i32_0 = arith.constant 0 : i32
    %c0_i32_1 = arith.constant 0 : i32
    return %c0_i32, %c0_i32_0 : i32, i32
  }
  func.func @transform_2(%arg0: i32) -> (i32, i32) {
    %c0_i32 = arith.constant 0 : i32
    %c0_i32_0 = arith.constant 0 : i32
    %c0_i32_1 = arith.constant 0 : i32
    return %c0_i32, %c0_i32_0 : i32, i32
  }
  func.func @transform_3(%arg0: i32) -> (i32, i32) {
    %c0_i32 = arith.constant 0 : i32
    %c0_i32_0 = arith.constant 0 : i32
    %c0_i32_1 = arith.constant 0 : i32
    return %c0_i32, %c0_i32_0 : i32, i32
  }
  func.func @transform_4(%arg0: i32) -> (i32, i32) {
    %c0_i32 = arith.constant 0 : i32
    %c0_i32_0 = arith.constant 0 : i32
    %c0_i32_1 = arith.constant 0 : i32
    return %c0_i32, %c0_i32_0 : i32, i32
  }
  func.func @transform_5(%arg0: i32) -> (i32, i32) {
    %c0_i32 = arith.constant 0 : i32
    %c0_i32_0 = arith.constant 0 : i32
    %c0_i32_1 = arith.constant 0 : i32
    return %c0_i32, %c0_i32_0 : i32, i32
  }
  func.func @transform_6(%arg0: i32) -> (i32, i32) {
    %c0_i32 = arith.constant 0 : i32
    %c0_i32_0 = arith.constant 0 : i32
    %c0_i32_1 = arith.constant 0 : i32
    return %c0_i32, %c0_i32_0 : i32, i32
  }
  func.func @transform_7(%arg0: i32) -> (i32, i32) {
    %c0_i32 = arith.constant 0 : i32
    %c0_i32_0 = arith.constant 0 : i32
    return %arg0, %c0_i32 : i32, i32
  }
}

</mosaic_0001>

<llo_original>
// kernel: actor_critic_forward.1
$region0: #{actor_critic_forward.1}
  #allocation0 [shape = 'u32[]', space=smem, size = 0x4, offset = 0x4, fixed_abs, tag = 'smem constant byte address 0x4 - core index']
  #allocation1 [shape = 'u32[72,128]{1,0:T(1,128)}', space=vmem, size = 0x9000, scoped, tag = 'internal scratch']
  %s0 = inlined_call_operand.vmem [shape: f32[8,93], index: 0, kind: input, shape index: {}]
  %s1 = inlined_call_operand.hbm [shape: f32[93,128], index: 1, kind: input, shape index: {}]
  %s2 = inlined_call_operand.vmem [shape: f32[1,128], index: 2, kind: input, shape index: {}]
  %s3 = inlined_call_operand.vmem [shape: f32[128,128], index: 3, kind: input, shape index: {}]
  %s4 = inlined_call_operand.vmem [shape: f32[1,128], index: 4, kind: input, shape index: {}]
  %s5 = inlined_call_operand.vmem [shape: f32[128,8], index: 5, kind: input, shape index: {}]
  %s6 = inlined_call_operand.vmem [shape: f32[1,8], index: 6, kind: input, shape index: {}]
  %s7 = inlined_call_operand.vmem [shape: f32[8,8], index: 7, kind: output, shape index: {}]
  %s8 = sld [smem:[#allocation0]]
  $region42: #{actor_critic_forward.1} parent=0
    _
  %s10 = ssub.s32 1, %s8
  %s11 = scalar_select 0, %s10, %s8
  $region1: #{actor_critic_forward.1} parent=0
    #allocation2 [shape = 'u8[49152]{0}', space=vmem, size = 0xc000, scoped, tag = 'input window, operand 1, single buffered']
    #allocation3 [shape = 's32[1]{0}', space=sflag, size = 0x4, scoped, tag = 'scoped memory for actor_critic_forward.1']
    %12 = vsyncpa [#allocation3], 0
    // Predicated region
    $region2: #{actor_critic_forward.1} parent=1 // pred_check
      _
    $region3: #{actor_critic_forward.1} parent=1 // pred_check_branch
      %14 = sbr.rel (0) target = $region5
    $region4: #{actor_critic_forward.1} parent=1 // pred_region
      _
    $region5: #{actor_critic_forward.1} parent=1 // pred_fallthru
      _
    // Predicated region
    $region6: #{actor_critic_forward.1} parent=1 // pred_check
      _
    $region7: #{actor_critic_forward.1} parent=1 // pred_check_branch
      %16 = sbr.rel (0) target = $region9
    $region8: #{actor_critic_forward.1} parent=1 // pred_region
      %18 = vsyncadd [#allocation3], 0
      %s19 = sshll.u32 %s1, 4
      %s20 = int_to_ptr.hbm [resolvable:$true] %s19
      %s21 = sshll.u32 [#allocation2], 4
      %s22 = int_to_ptr.vmem [resolvable:$true] %s21
      %27 = dma.hbm_to_vmem [thread:$0]  %s20, 1536, %s22, [#allocation3], 128, 128, 8
    $region9: #{actor_critic_forward.1} parent=1 // pred_fallthru
      _
    // Predicated region
    $region10: #{actor_critic_forward.1} parent=1 // pred_check
      _
    $region11: #{actor_critic_forward.1} parent=1 // pred_check_branch
      %29 = sbr.rel (0) target = $region13
    $region12: #{actor_critic_forward.1} parent=1 // pred_region
      _
    $region13: #{actor_critic_forward.1} parent=1 // pred_fallthru
      _
    // Predicated region
    $region14: #{actor_critic_forward.1} parent=1 // pred_check
      _
    $region15: #{actor_critic_forward.1} parent=1 // pred_check_branch
      %31 = sbr.rel (0) target = $region17
    $region16: #{actor_critic_forward.1} parent=1 // pred_region
      _
    $region17: #{actor_critic_forward.1} parent=1 // pred_fallthru
      _
    // Predicated region
    $region18: #{actor_critic_forward.1} parent=1 // pred_check
      _
    $region19: #{actor_critic_forward.1} parent=1 // pred_check_branch
      %33 = sbr.rel (0) target = $region21
    $region20: #{actor_critic_forward.1} parent=1 // pred_region
      _
    $region21: #{actor_critic_forward.1} parent=1 // pred_fallthru
      _
    // Predicated region
    $region22: #{actor_critic_forward.1} parent=1 // pred_check
      _
    $region23: #{actor_critic_forward.1} parent=1 // pred_check_branch
      %35 = sbr.rel (0) target = $region25
    $region24: #{actor_critic_forward.1} parent=1 // pred_region
      _
    $region25: #{actor_critic_forward.1} parent=1 // pred_fallthru
      _
    // Predicated region
    $region26: #{actor_critic_forward.1} parent=1 // pred_check
      _
    $region27: #{actor_critic_forward.1} parent=1 // pred_check_branch
      %37 = sbr.rel (0) target = $region29
    $region28: #{actor_critic_forward.1} parent=1 // pred_region
      _
    $region29: #{actor_critic_forward.1} parent=1 // pred_fallthru
      _
    // Predicated region
    $region30: #{actor_critic_forward.1} parent=1 // pred_check
      _
    $region31: #{actor_critic_forward.1} parent=1 // pred_check_branch
      %39 = sbr.rel (0) target = $region33
    $region32: #{actor_critic_forward.1} parent=1 // pred_region
      %41 = dma.done [#allocation3], 1536
    $region33: #{actor_critic_forward.1} parent=1 // pred_fallthru
      _
    %v42 = vld [vmem:[%s0] sm:$0xff]
    %v43 = vld [vmem:[#allocation2] sm:$0xff]
    %v44 = vld [vmem:[#allocation2 + $0x8] sm:$0xff]
    %v45 = vld [vmem:[#allocation2 + $0x10] sm:$0xff]
    %v46 = vld [vmem:[#allocation2 + $0x18] sm:$0xff]
    %v47 = vld [vmem:[#allocation2 + $0x20] sm:$0xff]
    %v48 = vld [vmem:[#allocation2 + $0x28] sm:$0xff]
    %v49 = vld [vmem:[#allocation2 + $0x30] sm:$0xff]
    %v50 = vld [vmem:[#allocation2 + $0x38] sm:$0xff]
    %v51 = vld [vmem:[#allocation2 + $0x40] sm:$0xff]
    %v52 = vld [vmem:[#allocation2 + $0x48] sm:$0xff]
    %v53 = vld [vmem:[#allocation2 + $0x50] sm:$0xff]
    %v54 = vld [vmem:[#allocation2 + $0x58] sm:$0x1f]
    %v55 = vld [vmem:[%s2] sm:$0x1]
    %v57 = vperm.slane %v55, 0
    %vm59 = vcmask 760832
    %v61 = vsel %vm59, %v42, 0
    %vm63 = vcmask 1044480
    %v65 = vsel %vm63, %v54, 0
    %67 = vmatpush.msra.mxu0 0.0
    %68 = vmatpush.msra.mxu0 0.0
    %69 = vmatpush.msra.mxu0 0.0
    %70 = vmatpush.msra.mxu0 0.0
    %71 = vmatpush.msra.mxu0 %v65
    %72 = vmatpush.msra.mxu0 %v53
    %73 = vmatpush.msra.mxu0 %v52
    %74 = vmatpush.msra.mxu0 %v51
    %75 = vmatpush.msra.mxu0 %v50
    %76 = vmatpush.msra.mxu0 %v49
    %77 = vmatpush.msra.mxu0 %v48
    %78 = vmatpush.msra.mxu0 %v47
    %79 = vmatpush.msra.mxu0 %v46
    %80 = vmatpush.msra.mxu0 %v45
    %81 = vmatpush.msra.mxu0 %v44
    %82 = vmatpush.msra.mxu0 %v43
    %83 = vmatmul.f32.gmra.mxu0 %v61
    %v84 = vpop.f32.mrf.mxu0
    %v85 = vadd.f32 %v57, %v84
    %86 = vdwg.mxu0
    %v87 = vmax.f32 %v85, 0.0
    %v88 = vld [vmem:[%s3] sm:$0xff]
    %v89 = vld [vmem:[%s3 + $0x8] sm:$0xff]
    %v90 = vld [vmem:[%s3 + $0x10] sm:$0xff]
    %v91 = vld [vmem:[%s3 + $0x18] sm:$0xff]
    %v92 = vld [vmem:[%s3 + $0x20] sm:$0xff]
    %v93 = vld [vmem:[%s3 + $0x28] sm:$0xff]
    %v94 = vld [vmem:[%s3 + $0x30] sm:$0xff]
    %v95 = vld [vmem:[%s3 + $0x38] sm:$0xff]
    %v96 = vld [vmem:[%s3 + $0x40] sm:$0xff]
    %v97 = vld [vmem:[%s3 + $0x48] sm:$0xff]
    %v98 = vld [vmem:[%s3 + $0x50] sm:$0xff]
    %v99 = vld [vmem:[%s3 + $0x58] sm:$0xff]
    %v100 = vld [vmem:[%s3 + $0x60] sm:$0xff]
    %v101 = vld [vmem:[%s3 + $0x68] sm:$0xff]
    %v102 = vld [vmem:[%s3 + $0x70] sm:$0xff]
    %v103 = vld [vmem:[%s3 + $0x78] sm:$0xff]
    %v104 = vld [vmem:[%s4] sm:$0x1]
    %v106 = vperm.slane %v104, 0
    %108 = vmatpush.msra.mxu0 %v103
    %109 = vmatpush.msra.mxu0 %v102
    %110 = vmatpush.msra.mxu0 %v101
    %111 = vmatpush.msra.mxu0 %v100
    %112 = vmatpush.msra.mxu0 %v99
    %113 = vmatpush.msra.mxu0 %v98
    %114 = vmatpush.msra.mxu0 %v97
    %115 = vmatpush.msra.mxu0 %v96
    %116 = vmatpush.msra.mxu0 %v95
    %117 = vmatpush.msra.mxu0 %v94
    %118 = vmatpush.msra.mxu0 %v93
    %119 = vmatpush.msra.mxu0 %v92
    %120 = vmatpush.msra.mxu0 %v91
    %121 = vmatpush.msra.mxu0 %v90
    %122 = vmatpush.msra.mxu0 %v89
    %123 = vmatpush.msra.mxu0 %v88
    %124 = vmatmul.f32.gmra.mxu0 %v87
    %v125 = vpop.f32.mrf.mxu0
    %v126 = vadd.f32 %v106, %v125
    %127 = vdwg.mxu0
    %v128 = vmax.f32 %v126, 0.0
    %v129 = vld [vmem:[%s5] sm:$0xff]
    %v130 = vld [vmem:[%s5 + $0x8] sm:$0xff]
    %v131 = vld [vmem:[%s5 + $0x10] sm:$0xff]
    %v132 = vld [vmem:[%s5 + $0x18] sm:$0xff]
    %v133 = vld [vmem:[%s5 + $0x20] sm:$0xff]
    %v134 = vld [vmem:[%s5 + $0x28] sm:$0xff]
    %v135 = vld [vmem:[%s5 + $0x30] sm:$0xff]
    %v136 = vld [vmem:[%s5 + $0x38] sm:$0xff]
    %v137 = vld [vmem:[%s5 + $0x40] sm:$0xff]
    %v138 = vld [vmem:[%s5 + $0x48] sm:$0xff]
    %v139 = vld [vmem:[%s5 + $0x50] sm:$0xff]
    %v140 = vld [vmem:[%s5 + $0x58] sm:$0xff]
    %v141 = vld [vmem:[%s5 + $0x60] sm:$0xff]
    %v142 = vld [vmem:[%s5 + $0x68] sm:$0xff]
    %v143 = vld [vmem:[%s5 + $0x70] sm:$0xff]
    %v144 = vld [vmem:[%s5 + $0x78] sm:$0xff]
    %v145 = vld [vmem:[%s6] sm:$0x1]
    %v147 = vperm.slane %v145, 0
    %149 = vmatpush.msra.mxu0 %v144
    %150 = vmatpush.msra.mxu0 %v143
    %151 = vmatpush.msra.mxu0 %v142
    %152 = vmatpush.msra.mxu0 %v141
    %153 = vmatpush.msra.mxu0 %v140
    %154 = vmatpush.msra.mxu0 %v139
    %155 = vmatpush.msra.mxu0 %v138
    %156 = vmatpush.msra.mxu0 %v137
    %157 = vmatpush.msra.mxu0 %v136
    %158 = vmatpush.msra.mxu0 %v135
    %159 = vmatpush.msra.mxu0 %v134
    %160 = vmatpush.msra.mxu0 %v133
    %161 = vmatpush.msra.mxu0 %v132
    %162 = vmatpush.msra.mxu0 %v131
    %163 = vmatpush.msra.mxu0 %v130
    %164 = vmatpush.msra.mxu0 %v129
    %165 = vmatmul.f32.gmra.mxu0 %v128
    %v166 = vpop.f32.mrf.mxu0
    %v167 = vadd.f32 %v147, %v166
    %168 = vdwg.mxu0
    %v169 = vlaneseq
    %v170 = vand.u32 %v169, 127
    %vm171 = vcmp.lt.s32.totalorder %v170, 5
    %v172 = vsel %vm171, %v167, -inf
    %vm173 = vcmask 64512
    %v174 = vsel %vm173, %v172, -inf
    %175 = vmax.xlane.f32.xlu0 %v174
    %v176 = vpop.xlane.xlu0 %175
    %v177 = vsub.f32 %v172, %v176
    %v178 = vmul.f32 %v177, 1.442695
    %v179 = vpow.pop %v178
    %v180 = vsel %vm173, %v179, 0.0
    %181 = vadd.xlane.f32.xlu0 %v180
    %v182 = vpop.xlane.xlu0 %181
    %v183 = vrcp.pop %v182
    %v184 = vmul.f32 %v182, %v183
    %v185 = vsub.f32 2.0, %v184
    %v186 = vmul.f32 %v183, %v185
    %v187 = vmul.f32 %v179, %v186
    %vm188 = vcmp.eq.s32.totalorder %v170, 5
    %v189 = vsel %vm188, %v167, %v187
    %190 = vst.msk [vmem:[%s7] sm:$0xff] %vm173, %v189
    // Predicated region
    $region34: #{actor_critic_forward.1} parent=1 // pred_check
      _
    $region35: #{actor_critic_forward.1} parent=1 // pred_check_branch
      %192 = sbr.rel (0) target = $region37
    $region36: #{actor_critic_forward.1} parent=1 // pred_region
      _
    $region37: #{actor_critic_forward.1} parent=1 // pred_fallthru
      _
    // Predicated region
    $region38: #{actor_critic_forward.1} parent=1 // pred_check
      _
    $region39: #{actor_critic_forward.1} parent=1 // pred_check_branch
      %194 = sbr.rel (0) target = $region41
    $region40: #{actor_critic_forward.1} parent=1 // pred_region
      _
    $region41: #{actor_critic_forward.1} parent=1 // pred_fallthru
      _
    %195 = vsyncpa [#allocation3], 1

</llo_original>
